<compile_context>
chip_gen: v6e
topology: v6e:2x2x1
jax: 0.10.0
libtpu: 0.0.40
codegen_flags: <defaults>
</compile_context>

<pallas_src>
import functools

import jax
import jax.numpy as jnp
from jax.experimental import pallas as pl
from jax.experimental.pallas import tpu as pltpu


# ---------------------------------------------------------------------------
# Pallas kernels: fused matmul (bf16 MXU operands, f32 accumulate)
#                 + per-output-channel shift (folded BN/bias; BN scale is
#                 pre-folded into B) + optional residual + activation, bf16 out.
# ---------------------------------------------------------------------------
def _fused_matmul_kernel(a_ref, b_ref, shift_ref, o_ref, *, act):
    acc = jnp.dot(a_ref[...], b_ref[...], preferred_element_type=jnp.float32)
    y = acc + shift_ref[...]
    if act == "relu":
        y = jnp.maximum(y, 0.0)
    elif act == "sigmoid":
        # exact sigmoid via one EUP tanh push (per perf review)
        y = 0.5 * jnp.tanh(0.5 * y) + 0.5
    o_ref[...] = y.astype(o_ref.dtype)


def _fused_matmul_res_kernel(a_ref, b_ref, shift_ref, res_ref, o_ref, *, act):
    acc = jnp.dot(a_ref[...], b_ref[...], preferred_element_type=jnp.float32)
    y = acc + shift_ref[...] + res_ref[...].astype(jnp.float32)
    if act == "relu":
        y = jnp.maximum(y, 0.0)
    o_ref[...] = y.astype(o_ref.dtype)


# ---------------------------------------------------------------------------
# Generation-aware tiling
# ---------------------------------------------------------------------------
_NUM_TC_CACHE = None


def _num_tensorcores():
    """TensorCores per chip: 1 on v5e/v6e, 2 on v7x.  Falls back to 1."""
    global _NUM_TC_CACHE
    if _NUM_TC_CACHE is not None:
        return _NUM_TC_CACHE
    n = 1
    try:
        info = pltpu.get_tpu_info()
        for attr in ("num_cores", "core_count", "num_tensorcores",
                     "tensorcore_count", "cores_per_chip"):
            v = getattr(info, attr, None)
            if isinstance(v, int) and v > 0:
                n = v
                break
    except Exception:
        n = 1
    _NUM_TC_CACHE = n
    return n


def _pick_tm(M):
    # On single-TC chips the grid is a serial loop: splitting M only pays
    # ~0.35us/step for zero parallelism, so use one whole-M tile (grid=(1,)).
    # With 2 TCs (v7x) keep >=2 parallel M blocks so both cores get work.
    n_tc = _num_tensorcores()
    if n_tc <= 1:
        return M
    for tm in (1024, 512, 256, 128, 64, 32, 16, 8):
        if M >= n_tc * tm:
            return tm
    return M


def fused_matmul(a, b, shift, act="none", residual=None, out_dtype=jnp.bfloat16):
    """out = act(a @ b + shift [+ residual]).

    a: (M, K) bf16 patch matrix, b: (K, N) bf16 weights (BN scale pre-folded),
    shift: (N,) f32.  residual (optional): (M, N), fused into the epilogue.
    """
    M, K = a.shape
    K2, N = b.shape
    assert K == K2
    if a.dtype != jnp.bfloat16:
        a = a.astype(jnp.bfloat16)
    if b.dtype != jnp.bfloat16:
        b = b.astype(jnp.bfloat16)

    tm = _pick_tm(M)
    Mp = pl.cdiv(M, tm) * tm
    if Mp != M:                              # pad only the ragged tail
        a = jnp.pad(a, ((0, Mp - M), (0, 0)))
        if residual is not None:
            residual = jnp.pad(residual, ((0, Mp - M), (0, 0)))
    shift2 = shift.reshape(1, N).astype(jnp.float32)

    in_specs = [
        pl.BlockSpec((tm, K), lambda i: (i, 0)),
        pl.BlockSpec((K, N), lambda i: (0, 0)),
        pl.BlockSpec((1, N), lambda i: (0, 0)),
    ]
    args = [a, b, shift2]
    if residual is not None:
        in_specs.append(pl.BlockSpec((tm, N), lambda i: (i, 0)))
        args.append(residual)
        kernel = functools.partial(_fused_matmul_res_kernel, act=act)
    else:
        kernel = functools.partial(_fused_matmul_kernel, act=act)

    out = pl.pallas_call(
        kernel,
        out_shape=jax.ShapeDtypeStruct((Mp, N), out_dtype),
        grid=(Mp // tm,),
        in_specs=in_specs,
        out_specs=pl.BlockSpec((tm, N), lambda i: (i, 0)),
        compiler_params=pltpu.CompilerParams(dimension_semantics=("parallel",)),
    )(*args)
    return out[:M] if Mp != M else out


# ---------------------------------------------------------------------------
# Conv helpers (im2col glue in XLA, matmul in the Pallas kernel)
# ---------------------------------------------------------------------------
def _im2col(x, kh, kw):
    # x: (N, Hp, Wp, C) already padded, stride 1
    N, Hp, Wp, C = x.shape
    Ho = Hp - kh + 1
    Wo = Wp - kw + 1
    cols = [x[:, i:i + Ho, j:j + Wo, :] for i in range(kh) for j in range(kw)]
    patches = jnp.concatenate(cols, axis=-1)            # (N, Ho, Wo, kh*kw*C)
    return patches.reshape(N * Ho * Wo, kh * kw * C), (N, Ho, Wo)


def conv2d(x_nhwc, w_mat, shift, *, kh=3, kw=3, pad=0, pad_mode="constant",
           act="none", residual=None):
    """Conv (stride 1) via im2col + fused Pallas matmul.
    w_mat: (kh*kw*Cin, Cout) bf16 with BN scale pre-folded."""
    if pad > 0:
        x_nhwc = jnp.pad(x_nhwc, ((0, 0), (pad, pad), (pad, pad), (0, 0)),
                         mode=pad_mode)
    patches, (N, Ho, Wo) = _im2col(x_nhwc, kh, kw)
    res2 = None
    if residual is not None:
        res2 = residual.reshape(N * Ho * Wo, -1)         # free row-major reshape
    out = fused_matmul(patches, w_mat, shift, act=act, residual=res2)
    return out.reshape(N, Ho, Wo, -1)


def _deconv_subpixel_weight(w_iohw):
    """ConvTranspose2d(k=3, s=2, p=1, op=1) as a single matmul on the UN-dilated
    input: 2x2 im2col patches, 4 sub-pixel phases side-by-side along N."""
    Cin, Cout, kh, kw = w_iohw.shape
    assert (kh, kw) == (3, 3)
    # equivalent direct-conv kernel on the zero-dilated input: flip + swap i/o
    wc = jnp.transpose(w_iohw[:, :, ::-1, ::-1], (1, 0, 2, 3))   # (Cout, Cin, 3, 3)
    z = jnp.zeros((Cout, Cin), wc.dtype)
    # taps of the 2x2 input patch, im2col order: (0,0),(0,1),(1,0),(1,1)
    phases = [
        [wc[:, :, 1, 1], z,              z,              z             ],  # (dy,dx)=(0,0)
        [wc[:, :, 1, 0], wc[:, :, 1, 2], z,              z             ],  # (0,1)
        [wc[:, :, 0, 1], z,              wc[:, :, 2, 1], z             ],  # (1,0)
        [wc[:, :, 0, 0], wc[:, :, 0, 2], wc[:, :, 2, 0], wc[:, :, 2, 2]],  # (1,1)
    ]
    cols = []
    for taps in phases:
        m = jnp.stack(taps, axis=0)                       # (4, Cout, Cin)
        cols.append(jnp.transpose(m, (0, 2, 1)).reshape(4 * Cin, Cout))
    return jnp.concatenate(cols, axis=1)                  # (4*Cin, 4*Cout)


def conv_transpose2d(x_nhwc, w_mat, shift4, act="relu"):
    """ConvTranspose2d(k=3, s=2, p=1, op=1) via sub-pixel decomposition.
    w_mat: (4*Cin, 4*Cout) bf16 prepped weight; shift4: (4*Cout,) f32."""
    N, H, W, Cin = x_nhwc.shape
    xp = jnp.pad(x_nhwc, ((0, 0), (0, 1), (0, 1), (0, 0)))   # 1 zero row/col at end
    patches, _ = _im2col(xp, 2, 2)                           # (N*H*W, 4*Cin)
    out = fused_matmul(patches, w_mat, shift4, act=act)      # (N*H*W, 4*Cout)
    Cout = out.shape[-1] // 4
    out = out.reshape(N, H, W, 2, 2, Cout)                   # (.., dy, dx, Cout)
    out = jnp.transpose(out, (0, 1, 3, 2, 4, 5)).reshape(N, 2 * H, 2 * W, Cout)
    return out


def _conv_transpose_ref(x_nhwc, w_iohw):
    """XLA reference for ConvTranspose2d(k=3, s=2, p=1, op=1), f32."""
    w_hwio = jnp.transpose(w_iohw[:, :, ::-1, ::-1], (2, 3, 0, 1))  # (kh,kw,Cin,Cout)
    return jax.lax.conv_general_dilated(
        x_nhwc, w_hwio, window_strides=(1, 1),
        padding=((1, 2), (1, 2)), lhs_dilation=(2, 2),
        dimension_numbers=("NHWC", "HWIO", "NHWC"))


# ---------------------------------------------------------------------------
# XLA pieces (degenerate shapes: keep out of Pallas per perf review)
# ---------------------------------------------------------------------------
def _modulation(z, snr, p):
    # Tiny (batch x ~33) MLPs: a 2-row Pallas matmul is pure launch overhead.
    z_mean = jnp.mean(z.astype(jnp.float32), axis=(1, 2))              # (N, C)
    z_cat = jnp.concatenate([z_mean, snr.astype(jnp.float32)], axis=-1)
    h1 = jax.nn.relu(z_cat @ p["multi_w1_t"] + p["multi_b1"])
    factor = jax.nn.sigmoid(h1 @ p["multi_w2_t"] + p["multi_b2"])
    h2 = jax.nn.relu(z_cat @ p["add_w1_t"] + p["add_b1"])
    addition = h2 @ p["add_w2_t"] + p["add_b2"]
    z = z.astype(jnp.float32) * factor[:, None, None, :] + addition[:, None, None, :]
    return z.astype(jnp.bfloat16)


def _final_layer_xla(z, w_hwio, b):
    # ReflectionPad2d(2) + Conv2d(ngf, output_nc=3, 5, bias=True) + Sigmoid.
    # Only 3 output channels -> a Pallas output would use <3% of the 128 lanes.
    zf = z.astype(jnp.float32)
    zp = jnp.pad(zf, ((0, 0), (2, 2), (2, 2), (0, 0)), mode="reflect")
    y = jax.lax.conv_general_dilated(
        zp, w_hwio, window_strides=(1, 1), padding="VALID",
        dimension_numbers=("NHWC", "HWIO", "NHWC"))
    return jax.nn.sigmoid(y + b)


# ---------------------------------------------------------------------------
# Parameter init (deterministic, matches PyTorch module shapes)
# ---------------------------------------------------------------------------
def init_params(key, *, output_nc=3, ngf=8, max_ngf=32, C_channel=4, C_extend=1,
                n_blocks=2, n_downsampling=2):
    keys = iter(jax.random.split(key, 64))

    def nrm(shape, std=0.08):
        return std * jax.random.normal(next(keys), shape, jnp.float32)

    def bn(c):
        return {"gamma": 1.0 + 0.1 * jax.random.normal(next(keys), (c,), jnp.float32),
                "beta": 0.1 * jax.random.normal(next(keys), (c,), jnp.float32),
                "mean": jnp.zeros((c,), jnp.float32),
                "var": jnp.ones((c,), jnp.float32)}

    mult = 2 ** n_downsampling
    ngf_dim = min(ngf * mult, max_ngf)
    p = {"mask_conv_w": nrm((ngf_dim, C_channel, 3, 3))}  # use_bias=False (BatchNorm)
    p["res"] = []
    for _ in range(n_blocks):
        p["res"].append({
            "conv1_w": nrm((ngf_dim, ngf_dim, 3, 3)), "bn1": bn(ngf_dim),
            "conv2_w": nrm((ngf_dim, ngf_dim, 3, 3)), "bn2": bn(ngf_dim),
            # modulation MLP Linear weights are (out, in) as in PyTorch
            "multi_w1": nrm((ngf_dim, ngf_dim + C_extend)), "multi_b1": nrm((ngf_dim,)),
            "multi_w2": nrm((ngf_dim, ngf_dim)),            "multi_b2": nrm((ngf_dim,)),
            "add_w1":   nrm((ngf_dim, ngf_dim + C_extend)), "add_b1":   nrm((ngf_dim,)),
            "add_w2":   nrm((ngf_dim, ngf_dim)),            "add_b2":   nrm((ngf_dim,)),
        })
    p["up"] = []
    for i in range(n_downsampling):
        mult_i = 2 ** (n_downsampling - i)
        cin = min(ngf * mult_i, max_ngf)
        cout = min(ngf * mult_i // 2, max_ngf)
        p["up"].append({"w": nrm((cin, cout, 3, 3)), "bn": bn(cout)})  # (in,out,kh,kw)
    p["final_w"] = nrm((output_nc, ngf, 5, 5))
    p["final_b"] = nrm((output_nc,))
    return p


# ---------------------------------------------------------------------------
# One-time weight preprocessing (hoisted OUT of the jitted forward)
# ---------------------------------------------------------------------------
def preprocess_params(params, eps=1e-5):
    """OIHW->matmul transposes, sub-pixel deconv weights, folded BatchNorm with
    the scale pre-multiplied into B, bf16 casts of the MXU B operands."""
    def conv_w_mat(w_oihw, scale=None):
        Cout, Cin, kh, kw = w_oihw.shape
        w = jnp.transpose(w_oihw, (2, 3, 1, 0)).reshape(kh * kw * Cin, Cout)
        if scale is not None:
            w = w * scale[None, :]
        return w.astype(jnp.bfloat16)

    def fold(bn):
        scale = bn["gamma"] / jnp.sqrt(bn["var"] + eps)
        shift = bn["beta"] - bn["mean"] * scale
        return scale, shift.astype(jnp.float32)

    prep = {"mask_w": conv_w_mat(params["mask_conv_w"]),
            "mask_shift": jnp.zeros((params["mask_conv_w"].shape[0],), jnp.float32),
            "res": [], "up": []}
    for p in params["res"]:
        s1, sh1 = fold(p["bn1"])
        s2, sh2 = fold(p["bn2"])
        prep["res"].append({
            "w1": conv_w_mat(p["conv1_w"], s1), "sh1": sh1,
            "w2": conv_w_mat(p["conv2_w"], s2), "sh2": sh2,
            "multi_w1_t": p["multi_w1"].T, "multi_b1": p["multi_b1"],
            "multi_w2_t": p["multi_w2"].T, "multi_b2": p["multi_b2"],
            "add_w1_t": p["add_w1"].T, "add_b1": p["add_b1"],
            "add_w2_t": p["add_w2"].T, "add_b2": p["add_b2"],
        })
    for p in params["up"]:
        s, sh = fold(p["bn"])
        w_mat = _deconv_subpixel_weight(p["w"])                 # (4*Cin, 4*Cout)
        w_mat = (w_mat * jnp.tile(s, 4)[None, :]).astype(jnp.bfloat16)
        prep["up"].append({"w": w_mat, "shift": jnp.tile(sh, 4).astype(jnp.float32)})
    prep["final_w_hwio"] = jnp.transpose(params["final_w"], (2, 3, 1, 0))
    prep["final_b"] = params["final_b"]
    return prep


# ---------------------------------------------------------------------------
# JSCC_Decoder forward
# ---------------------------------------------------------------------------
def jscc_decoder_forward(prep, x_nchw, snr):
    # NCHW at the API boundary (PyTorch), NHWC + bf16 activations internally.
    z = jnp.transpose(x_nchw, (0, 2, 3, 1)).astype(jnp.bfloat16)

    # mask_conv: Conv2d(C_channel, ngf_dim, 3, pad=1, bias=False), no norm/act
    z = conv2d(z, prep["mask_w"], prep["mask_shift"], pad=1, pad_mode="constant")

    for p in prep["res"]:
        # ResnetBlock: reflect-pad conv + BN + ReLU, reflect-pad conv + BN,
        # with the residual skip fused into the second conv's epilogue.
        h = conv2d(z, p["w1"], p["sh1"], pad=1, pad_mode="reflect", act="relu")
        z = conv2d(h, p["w2"], p["sh2"], pad=1, pad_mode="reflect", act="none",
                   residual=z)
        # modulation(z, SNR): tiny MLPs in plain XLA
        z = _modulation(z, snr, p)

    # upsampling: ConvTranspose2d(k=3, s=2, p=1, op=1, bias=False) + BN + ReLU
    for p in prep["up"]:
        z = conv_transpose2d(z, p["w"], p["shift"], act="relu")

    # ReflectionPad2d(2) + Conv2d(ngf, output_nc, 5, bias=True) + Sigmoid (XLA)
    z = _final_layer_xla(z, prep["final_w_hwio"], prep["final_b"])

    return jnp.transpose(z, (0, 3, 1, 2))  # back to NCHW


if __name__ == "__main__":
    key = jax.random.PRNGKey(0)
    kp, kx, ks, kt, kw = jax.random.split(key, 5)

    # small config: output_nc=3, ngf=8, max_ngf=32, C_channel=4, n_blocks=2, n_downsampling=2
    params = init_params(kp, output_nc=3, ngf=8, max_ngf=32, C_channel=4,
                         C_extend=1, n_blocks=2, n_downsampling=2)
    prep = preprocess_params(params)   # one-time weight prep, outside the jit

    x = jax.random.normal(kx, (2, 4, 8, 8), jnp.float32)          # NCHW latent input
    snr = jax.random.uniform(ks, (2, 1), jnp.float32, 0.0, 20.0)  # CSI / SNR

    # Numeric self-check of the sub-pixel ConvTranspose path vs an XLA
    # lhs-dilated conv reference (addresses the review's correctness concern).
    xt = jax.random.normal(kt, (2, 8, 8, 32), jnp.float32)
    wt = 0.08 * jax.random.normal(kw, (32, 16, 3, 3), jnp.float32)
    w_mat_t = _deconv_subpixel_weight(wt).astype(jnp.bfloat16)
    got = conv_transpose2d(xt.astype(jnp.bfloat16), w_mat_t,
                           jnp.zeros((64,), jnp.float32), act="none")
    ref = _conv_transpose_ref(xt, wt)
    got = jax.block_until_ready(got).astype(jnp.float32)
    assert got.shape == ref.shape, (got.shape, ref.shape)
    assert float(jnp.max(jnp.abs(got - ref))) < 0.1, "sub-pixel deconv mismatch"

    out = jax.jit(jscc_decoder_forward)(prep, x, snr)
    out = jax.block_until_ready(out)

    assert out.shape == (2, 3, 32, 32), out.shape
    assert bool(jnp.all(jnp.isfinite(out)))
    assert bool(jnp.all((out >= 0.0) & (out <= 1.0)))  # sigmoid output range
    print("KERNEL_OK")
</pallas_src>

<mosaic_0001>
module attributes {stable_mosaic.version = 11 : i64} {
  func.func @_fused_matmul_kernel(%arg0: i32, %arg1: memref<128x128xbf16, #tpu.memory_space<vmem>>, %arg2: memref<128x64xbf16, #tpu.memory_space<vmem>>, %arg3: memref<1x64xf32, #tpu.memory_space<vmem>>, %arg4: memref<128x64xbf16, #tpu.memory_space<vmem>>) attributes {dimension_semantics = [#tpu.dimension_semantics<parallel>], iteration_bounds = array<i64: 1>, scalar_prefetch = 0 : i64, scratch_operands = 0 : i64, tpu.core_type = #tpu.core_type<tc>, window_params = [{transform_indices = @transform_0, window_bounds = array<i64: 128, 128>}, {pipeline_mode = #tpu.pipeline_mode<synchronous>, transform_indices = @transform_1, window_bounds = array<i64: 128, 64>}, {pipeline_mode = #tpu.pipeline_mode<synchronous>, transform_indices = @transform_2, window_bounds = array<i64: 1, 64>}, {transform_indices = @transform_3, window_bounds = array<i64: 128, 64>}]} {
    %c0 = arith.constant 0 : index
    %c0_0 = arith.constant 0 : index
    %0 = vector.load %arg1[%c0, %c0_0] : memref<128x128xbf16, #tpu.memory_space<vmem>>, vector<128x128xbf16>
    %c0_1 = arith.constant 0 : index
    %c0_2 = arith.constant 0 : index
    %1 = vector.load %arg2[%c0_1, %c0_2] : memref<128x64xbf16, #tpu.memory_space<vmem>>, vector<128x64xbf16>
    %cst = arith.constant dense<0.000000e+00> : vector<128x64xf32>
    %2 = tpu.matmul %0, %1, %cst {dimension_numbers = #tpu.dot_dimension_numbers<[1], [0], [0], [1], [0, 0, 1, 1], [], []>} : vector<128x128xbf16>, vector<128x64xbf16>, vector<128x64xf32> -> vector<128x64xf32>
    %c0_3 = arith.constant 0 : index
    %c0_4 = arith.constant 0 : index
    %3 = vector.load %arg3[%c0_3, %c0_4] : memref<1x64xf32, #tpu.memory_space<vmem>>, vector<1x64xf32>
    %4 = vector.broadcast %3 : vector<1x64xf32> to vector<128x64xf32>
    %5 = arith.addf %2, %4 : vector<128x64xf32>
    %6 = arith.truncf %5 : vector<128x64xf32> to vector<128x64xbf16>
    %c0_5 = arith.constant 0 : index
    %c0_6 = arith.constant 0 : index
    %7 = vector.load %arg4[%c0_5, %c0_6] : memref<128x64xbf16, #tpu.memory_space<vmem>>, vector<128x64xbf16>
    tpu.vector_store %arg4[%c0_5, %c0_6], %6 {strides = array<i32>} : memref<128x64xbf16, #tpu.memory_space<vmem>>, vector<128x64xbf16>,
    return
  }
  func.func @transform_0(%arg0: i32) -> (i32, i32) {
    %c0_i32 = arith.constant 0 : i32
    %c0_i32_0 = arith.constant 0 : i32
    return %arg0, %c0_i32 : i32, i32
  }
  func.func @transform_1(%arg0: i32) -> (i32, i32) {
    %c0_i32 = arith.constant 0 : i32
    %c0_i32_0 = arith.constant 0 : i32
    %c0_i32_1 = arith.constant 0 : i32
    return %c0_i32, %c0_i32_0 : i32, i32
  }
  func.func @transform_2(%arg0: i32) -> (i32, i32) {
    %c0_i32 = arith.constant 0 : i32
    %c0_i32_0 = arith.constant 0 : i32
    %c0_i32_1 = arith.constant 0 : i32
    return %c0_i32, %c0_i32_0 : i32, i32
  }
  func.func @transform_3(%arg0: i32) -> (i32, i32) {
    %c0_i32 = arith.constant 0 : i32
    %c0_i32_0 = arith.constant 0 : i32
    return %arg0, %c0_i32 : i32, i32
  }
}

</mosaic_0001>

<llo_original>
// kernel: tpu_custom_call.1
$region0: #{tpu_custom_call.1}
  #allocation0 [shape = 'u32[]', space=smem, size = 0x4, offset = 0x4, fixed_abs, tag = 'smem constant byte address 0x4 - core index']
  #allocation1 [shape = 'u32[144,128]{1,0:T(1,128)}', space=vmem, size = 0x12000, scoped, tag = 'internal scratch']
  %s0 = inlined_call_operand.vmem [shape: bf16[128,128], index: 0, kind: input, shape index: {}]
  %s1 = inlined_call_operand.vmem [shape: bf16[128,64], index: 1, kind: input, shape index: {}]
  %s2 = inlined_call_operand.vmem [shape: f32[1,64], index: 2, kind: input, shape index: {}]
  %s3 = inlined_call_operand.vmem [shape: bf16[128,64], index: 3, kind: output, shape index: {}]
  %s4 = sld [smem:[#allocation0]]
  $region22: #{tpu_custom_call.1} parent=0
    _
  %s6 = ssub.s32 1, %s4
  %s7 = scalar_select 0, %s6, %s4
  // Predicated region
  $region2: #{tpu_custom_call.1} parent=0 // pred_check
    _
  $region3: #{tpu_custom_call.1} parent=0 // pred_check_branch
    %9 = sbr.rel (0) target = $region5
  $region4: #{tpu_custom_call.1} parent=0 // pred_region
    _
  $region5: #{tpu_custom_call.1} parent=0 // pred_fallthru
    _
  // Predicated region
  $region6: #{tpu_custom_call.1} parent=0 // pred_check
    _
  $region7: #{tpu_custom_call.1} parent=0 // pred_check_branch
    %11 = sbr.rel (0) target = $region9
  $region8: #{tpu_custom_call.1} parent=0 // pred_region
    _
  $region9: #{tpu_custom_call.1} parent=0 // pred_fallthru
    _
  // Predicated region
  $region10: #{tpu_custom_call.1} parent=0 // pred_check
    _
  $region11: #{tpu_custom_call.1} parent=0 // pred_check_branch
    %13 = sbr.rel (0) target = $region13
  $region12: #{tpu_custom_call.1} parent=0 // pred_region
    _
  $region13: #{tpu_custom_call.1} parent=0 // pred_fallthru
    _
  %v15 = vld [vmem:[%s0] sm:$0xf]
  %v16 = vld [vmem:[%s0 + $0x4] sm:$0xf]
  %v17 = vld [vmem:[%s0 + $0x8] sm:$0xf]
  %v18 = vld [vmem:[%s0 + $0xc] sm:$0xf]
  %v19 = vld [vmem:[%s0 + $0x10] sm:$0xf]
  %v20 = vld [vmem:[%s0 + $0x14] sm:$0xf]
  %v21 = vld [vmem:[%s0 + $0x18] sm:$0xf]
  %v22 = vld [vmem:[%s0 + $0x1c] sm:$0xf]
  %v23 = vld [vmem:[%s0 + $0x20] sm:$0xf]
  %v24 = vld [vmem:[%s0 + $0x24] sm:$0xf]
  %v25 = vld [vmem:[%s0 + $0x28] sm:$0xf]
  %v26 = vld [vmem:[%s0 + $0x2c] sm:$0xf]
  %v27 = vld [vmem:[%s0 + $0x30] sm:$0xf]
  %v28 = vld [vmem:[%s0 + $0x34] sm:$0xf]
  %v29 = vld [vmem:[%s0 + $0x38] sm:$0xf]
  %v30 = vld [vmem:[%s0 + $0x3c] sm:$0xf]
  %v31 = vld [vmem:[%s1] sm:$0xf]
  %v32 = vld [vmem:[%s1 + $0x4] sm:$0xf]
  %v33 = vld [vmem:[%s1 + $0x8] sm:$0xf]
  %v34 = vld [vmem:[%s1 + $0xc] sm:$0xf]
  %v35 = vld [vmem:[%s1 + $0x10] sm:$0xf]
  %v36 = vld [vmem:[%s1 + $0x14] sm:$0xf]
  %v37 = vld [vmem:[%s1 + $0x18] sm:$0xf]
  %v38 = vld [vmem:[%s1 + $0x1c] sm:$0xf]
  %v39 = vld [vmem:[%s1 + $0x20] sm:$0xf]
  %v40 = vld [vmem:[%s1 + $0x24] sm:$0xf]
  %v41 = vld [vmem:[%s1 + $0x28] sm:$0xf]
  %v42 = vld [vmem:[%s1 + $0x2c] sm:$0xf]
  %v43 = vld [vmem:[%s1 + $0x30] sm:$0xf]
  %v44 = vld [vmem:[%s1 + $0x34] sm:$0xf]
  %v45 = vld [vmem:[%s1 + $0x38] sm:$0xf]
  %v46 = vld [vmem:[%s1 + $0x3c] sm:$0xf]
  %v47 = vld [vmem:[%s2] sm:$0x1]
  %v49 = vlaneseq
  %v50 = vshrl.u32 %v49, 7
  %v51 = vsub.s32 0, %v50
  %v52 = vrot.slane %v47, %v51
  %v70 = vunpack.c.l.b16 %v15
  %v71 = vunpack.c.l.b16 %v16
  %v72 = vunpack.c.l.b16 %v17
  %v73 = vunpack.c.l.b16 %v18
  %v74 = vunpack.c.l.b16 %v19
  %v75 = vunpack.c.l.b16 %v20
  %v76 = vunpack.c.l.b16 %v21
  %v77 = vunpack.c.l.b16 %v22
  %v78 = vunpack.c.l.b16 %v23
  %v79 = vunpack.c.l.b16 %v24
  %v80 = vunpack.c.l.b16 %v25
  %v81 = vunpack.c.l.b16 %v26
  %v82 = vunpack.c.l.b16 %v27
  %v83 = vunpack.c.l.b16 %v28
  %v84 = vunpack.c.l.b16 %v29
  %v85 = vunpack.c.l.b16 %v30
  %v86 = vpack.c.b16 %v71, %v70
  %v87 = vpack.c.b16 %v73, %v72
  %v88 = vpack.c.b16 %v75, %v74
  %v89 = vpack.c.b16 %v77, %v76
  %v90 = vpack.c.b16 %v79, %v78
  %v91 = vpack.c.b16 %v81, %v80
  %v92 = vpack.c.b16 %v83, %v82
  %v93 = vpack.c.b16 %v85, %v84
  %v118 = vunpack.c.l.b16 %v31
  %v119 = vunpack.c.l.b16 %v32
  %v120 = vunpack.c.l.b16 %v33
  %v121 = vunpack.c.l.b16 %v34
  %v122 = vunpack.c.l.b16 %v35
  %v123 = vunpack.c.l.b16 %v36
  %v124 = vunpack.c.l.b16 %v37
  %v125 = vunpack.c.l.b16 %v38
  %v126 = vunpack.c.l.b16 %v39
  %v127 = vunpack.c.l.b16 %v40
  %v128 = vunpack.c.l.b16 %v41
  %v129 = vunpack.c.l.b16 %v42
  %v130 = vunpack.c.l.b16 %v43
  %v131 = vunpack.c.l.b16 %v44
  %v132 = vunpack.c.l.b16 %v45
  %v133 = vunpack.c.l.b16 %v46
  %v134 = vpack.c.b16 %v119, %v118
  %v135 = vpack.c.b16 %v121, %v120
  %v136 = vpack.c.b16 %v123, %v122
  %v137 = vpack.c.b16 %v125, %v124
  %v138 = vpack.c.b16 %v127, %v126
  %v139 = vpack.c.b16 %v129, %v128
  %v140 = vpack.c.b16 %v131, %v130
  %v141 = vpack.c.b16 %v133, %v132
  %150 = vmatprep.subr.bf16.mxu0 0
  %151 = vmatpush1.bf16.msra.mxu0 %v141
  %152 = vmatprep.subr.bf16.mxu0 0
  %153 = vmatpush1.bf16.msra.mxu0 %v140
  %154 = vmatprep.subr.bf16.mxu0 0
  %155 = vmatpush1.bf16.msra.mxu0 %v139
  %156 = vmatprep.subr.bf16.mxu0 0
  %157 = vmatpush1.bf16.msra.mxu0 %v138
  %158 = vmatprep.subr.bf16.mxu0 0
  %159 = vmatpush1.bf16.msra.mxu0 %v137
  %160 = vmatprep.subr.bf16.mxu0 0
  %161 = vmatpush1.bf16.msra.mxu0 %v136
  %162 = vmatprep.subr.bf16.mxu0 0
  %163 = vmatpush1.bf16.msra.mxu0 %v135
  %164 = vmatprep.subr.bf16.mxu0 0
  %165 = vmatpush1.bf16.msra.mxu0 %v134
  %166 = vmatprep.subr.bf16.mxu0 0
  %167 = vmatpush2.bf16.msra.mxu0 0
  %168 = vmatprep.subr.bf16.mxu0 0
  %169 = vmatpush2.bf16.msra.mxu0 0
  %170 = vmatprep.subr.bf16.mxu0 0
  %171 = vmatpush2.bf16.msra.mxu0 0
  %172 = vmatprep.subr.bf16.mxu0 0
  %173 = vmatpush2.bf16.msra.mxu0 0
  %174 = vmatprep.subr.bf16.mxu0 0
  %175 = vmatpush2.bf16.msra.mxu0 0
  %176 = vmatprep.subr.bf16.mxu0 0
  %177 = vmatpush2.bf16.msra.mxu0 0
  %178 = vmatprep.subr.bf16.mxu0 0
  %179 = vmatpush2.bf16.msra.mxu0 0
  %180 = vmatprep.subr.bf16.mxu0 0
  %181 = vmatpush2.bf16.msra.mxu0 0
  %182 = vmatprep.mubr.bf16.mxu0 0
  %183 = vmatmul.mubr.bf16.gmra.mxu0 %v86
  %v184 = vpop.f32.mrf.mxu0
  %v185 = vadd.f32 %v52, %v184
  %v186 = vpop.f32.mrf.mxu0
  %v187 = vpop.f32.mrf.mxu0
  %v188 = vadd.f32 %v52, %v187
  %v189 = vpop.f32.mrf.mxu0
  %190 = vmatprep.mubr.bf16.mxu0 0
  %191 = vmatmul.mubr.bf16.gmra.mxu0 %v87
  %v192 = vpop.f32.mrf.mxu0
  %v193 = vadd.f32 %v52, %v192
  %v194 = vpop.f32.mrf.mxu0
  %v195 = vpop.f32.mrf.mxu0
  %v196 = vadd.f32 %v52, %v195
  %v197 = vpop.f32.mrf.mxu0
  %198 = vmatprep.mubr.bf16.mxu0 0
  %199 = vmatmul.mubr.bf16.gmra.mxu0 %v88
  %v200 = vpop.f32.mrf.mxu0
  %v201 = vadd.f32 %v52, %v200
  %v202 = vpop.f32.mrf.mxu0
  %v203 = vpop.f32.mrf.mxu0
  %v204 = vadd.f32 %v52, %v203
  %v205 = vpop.f32.mrf.mxu0
  %206 = vmatprep.mubr.bf16.mxu0 0
  %207 = vmatmul.mubr.bf16.gmra.mxu0 %v89
  %v208 = vpop.f32.mrf.mxu0
  %v209 = vadd.f32 %v52, %v208
  %v210 = vpop.f32.mrf.mxu0
  %v211 = vpop.f32.mrf.mxu0
  %v212 = vadd.f32 %v52, %v211
  %v213 = vpop.f32.mrf.mxu0
  %214 = vmatprep.mubr.bf16.mxu0 0
  %215 = vmatmul.mubr.bf16.gmra.mxu0 %v90
  %v216 = vpop.f32.mrf.mxu0
  %v217 = vadd.f32 %v52, %v216
  %v218 = vpop.f32.mrf.mxu0
  %v219 = vpop.f32.mrf.mxu0
  %v220 = vadd.f32 %v52, %v219
  %v221 = vpop.f32.mrf.mxu0
  %222 = vmatprep.mubr.bf16.mxu0 0
  %223 = vmatmul.mubr.bf16.gmra.mxu0 %v91
  %v224 = vpop.f32.mrf.mxu0
  %v225 = vadd.f32 %v52, %v224
  %v226 = vpop.f32.mrf.mxu0
  %v227 = vpop.f32.mrf.mxu0
  %v228 = vadd.f32 %v52, %v227
  %v229 = vpop.f32.mrf.mxu0
  %230 = vmatprep.mubr.bf16.mxu0 0
  %231 = vmatmul.mubr.bf16.gmra.mxu0 %v92
  %v232 = vpop.f32.mrf.mxu0
  %v233 = vadd.f32 %v52, %v232
  %v234 = vpop.f32.mrf.mxu0
  %v235 = vpop.f32.mrf.mxu0
  %v236 = vadd.f32 %v52, %v235
  %v237 = vpop.f32.mrf.mxu0
  %238 = vmatprep.mubr.bf16.mxu0 0
  %239 = vmatmul.mubr.bf16.gmra.mxu0 %v93
  %v240 = vpop.f32.mrf.mxu0
  %v241 = vadd.f32 %v52, %v240
  %v242 = vpop.f32.mrf.mxu0
  %v243 = vpop.f32.mrf.mxu0
  %v244 = vadd.f32 %v52, %v243
  %v245 = vpop.f32.mrf.mxu0
  %246 = vdwg.mxu0
  %v247 = vpack.c.bf16 %v188, %v185
  %v248 = vpack.c.bf16 %v196, %v193
  %v249 = vpack.c.bf16 %v204, %v201
  %v250 = vpack.c.bf16 %v212, %v209
  %v251 = vpack.c.bf16 %v220, %v217
  %v252 = vpack.c.bf16 %v228, %v225
  %v253 = vpack.c.bf16 %v236, %v233
  %v254 = vpack.c.bf16 %v244, %v241
  %v263 = vunpack.c.l.b16 %v247
  %v264 = vunpack.c.h.b16 %v247
  %v265 = vunpack.c.l.b16 %v248
  %v266 = vunpack.c.h.b16 %v248
  %v267 = vunpack.c.l.b16 %v249
  %v268 = vunpack.c.h.b16 %v249
  %v269 = vunpack.c.l.b16 %v250
  %v270 = vunpack.c.h.b16 %v250
  %v271 = vunpack.c.l.b16 %v251
  %v272 = vunpack.c.h.b16 %v251
  %v273 = vunpack.c.l.b16 %v252
  %v274 = vunpack.c.h.b16 %v252
  %v275 = vunpack.c.l.b16 %v253
  %v276 = vunpack.c.h.b16 %v253
  %v277 = vunpack.c.l.b16 %v254
  %v278 = vunpack.c.h.b16 %v254
  %v279 = vpack.c.b16 %v263, %v263
  %v280 = vpack.c.b16 %v264, %v264
  %v281 = vpack.c.b16 %v265, %v265
  %v282 = vpack.c.b16 %v266, %v266
  %v283 = vpack.c.b16 %v267, %v267
  %v284 = vpack.c.b16 %v268, %v268
  %v285 = vpack.c.b16 %v269, %v269
  %v286 = vpack.c.b16 %v270, %v270
  %v287 = vpack.c.b16 %v271, %v271
  %v288 = vpack.c.b16 %v272, %v272
  %v289 = vpack.c.b16 %v273, %v273
  %v290 = vpack.c.b16 %v274, %v274
  %v291 = vpack.c.b16 %v275, %v275
  %v292 = vpack.c.b16 %v276, %v276
  %v293 = vpack.c.b16 %v277, %v277
  %v294 = vpack.c.b16 %v278, %v278
  %vm311 = vcmask 519168
  %312 = vst.msk [vmem:[%s3] sm:$0xf] %vm311, %v279
  %313 = vst.msk [vmem:[%s3 + $0x4] sm:$0xf] %vm311, %v280
  %314 = vst.msk [vmem:[%s3 + $0x8] sm:$0xf] %vm311, %v281
  %315 = vst.msk [vmem:[%s3 + $0xc] sm:$0xf] %vm311, %v282
  %316 = vst.msk [vmem:[%s3 + $0x10] sm:$0xf] %vm311, %v283
  %317 = vst.msk [vmem:[%s3 + $0x14] sm:$0xf] %vm311, %v284
  %318 = vst.msk [vmem:[%s3 + $0x18] sm:$0xf] %vm311, %v285
  %319 = vst.msk [vmem:[%s3 + $0x1c] sm:$0xf] %vm311, %v286
  %320 = vst.msk [vmem:[%s3 + $0x20] sm:$0xf] %vm311, %v287
  %321 = vst.msk [vmem:[%s3 + $0x24] sm:$0xf] %vm311, %v288
  %322 = vst.msk [vmem:[%s3 + $0x28] sm:$0xf] %vm311, %v289
  %323 = vst.msk [vmem:[%s3 + $0x2c] sm:$0xf] %vm311, %v290
  %324 = vst.msk [vmem:[%s3 + $0x30] sm:$0xf] %vm311, %v291
  %325 = vst.msk [vmem:[%s3 + $0x34] sm:$0xf] %vm311, %v292
  %326 = vst.msk [vmem:[%s3 + $0x38] sm:$0xf] %vm311, %v293
  %327 = vst.msk [vmem:[%s3 + $0x3c] sm:$0xf] %vm311, %v294
  // Predicated region
  $region14: #{tpu_custom_call.1} parent=0 // pred_check
    _
  $region15: #{tpu_custom_call.1} parent=0 // pred_check_branch
    %329 = sbr.rel (0) target = $region17
  $region16: #{tpu_custom_call.1} parent=0 // pred_region
    _
  $region17: #{tpu_custom_call.1} parent=0 // pred_fallthru
    _
  // Predicated region
  $region18: #{tpu_custom_call.1} parent=0 // pred_check
    _
  $region19: #{tpu_custom_call.1} parent=0 // pred_check_branch
    %331 = sbr.rel (0) target = $region21
  $region20: #{tpu_custom_call.1} parent=0 // pred_region
    _
  $region21: #{tpu_custom_call.1} parent=0 // pred_fallthru
    _

</llo_original>
